<compile_context>
chip_gen: v5e
topology: v5e:2x2
jax: 0.10.0
libtpu: 0.0.40
codegen_flags: <defaults>
</compile_context>

<pallas_src>
import functools

import jax
import jax.numpy as jnp
import numpy as np
from jax.experimental import pallas as pl
from jax.experimental.pallas import tpu as pltpu


# ----------------------------------------------------------------------------- kernels
def mlp_kernel_resident(x_ref, w1_ref, b1_ref, w2_ref, b2_ref, w3_ref, b3_ref, o_ref):
    """All weights resident in VMEM; one batch tile per grid step."""
    # Layer 1: Linear + ReLU (MXU matmul, f32 accumulation; epilogue stays f32).
    h1 = jnp.dot(x_ref[...], w1_ref[...], preferred_element_type=jnp.float32)
    h1 = jnp.maximum(h1 + b1_ref[...], 0.0)
    # Layer 2: Linear + ReLU.
    h2 = jnp.dot(h1.astype(w2_ref.dtype), w2_ref[...],
                 preferred_element_type=jnp.float32)
    h2 = jnp.maximum(h2 + b2_ref[...], 0.0)
    # Layer 3: Linear (logits, lane-dense padded output).
    out = jnp.dot(h2.astype(w3_ref.dtype), w3_ref[...],
                  preferred_element_type=jnp.float32)
    o_ref[...] = (out + b3_ref[...]).astype(o_ref.dtype)


def mlp_kernel_streamed(x_ref, w1_ref, b1_ref, w2_ref, b2_ref, w3_ref, b3_ref,
                        o_ref, acc_ref):
    """Hidden dim tiled: grid = (batch_tiles, h_tiles); acc_ref is the layer-2 f32 acc."""
    k = pl.program_id(1)

    @pl.when(k == 0)
    def _init():
        acc_ref[...] = jnp.zeros_like(acc_ref)

    # Layer 1, column tile k of w1 -> h1_k, immediately consumed by layer 2's k-tile.
    h1_k = jnp.dot(x_ref[...], w1_ref[...], preferred_element_type=jnp.float32)
    h1_k = jnp.maximum(h1_k + b1_ref[...], 0.0)
    acc_ref[...] += jnp.dot(h1_k.astype(w2_ref.dtype), w2_ref[...],
                            preferred_element_type=jnp.float32)

    @pl.when(k == pl.num_programs(1) - 1)
    def _finalize():
        h2 = jnp.maximum(acc_ref[...] + b2_ref[...], 0.0)
        out = jnp.dot(h2.astype(w3_ref.dtype), w3_ref[...],
                      preferred_element_type=jnp.float32)
        o_ref[...] = (out + b3_ref[...]).astype(o_ref.dtype)


# ----------------------------------------------------------------------------- helpers
def _tpu_defaults():
    """(default batch tile, usable VMEM budget bytes) for the current TPU generation."""
    try:
        vmem_cap = int(pltpu.get_tpu_info().vmem_capacity_bytes)
    except Exception:
        vmem_cap = 64 << 20            # conservative (v7x-sized) if we cannot query
    try:
        kind = jax.devices()[0].device_kind.lower()
    except Exception:
        kind = ""
    is_v5e = ("v5 lite" in kind) or ("v5e" in kind) or ("v5litepod" in kind)
    # v5e MXU is 4x128x128 -> 128-row tiles already fill it; v6e/v7x MXU is 2x256x256.
    batch_tile = 128 if is_v5e else 256
    # ~8 MiB pipeline/compiler headroom: ~56 MiB usable on v7x, ~120 MiB on v5e/v6e.
    budget = max(vmem_cap - (8 << 20), 32 << 20)
    return batch_tile, budget


def _const_spec(shape, index_map):
    """BlockSpec for constant-index operands (weights/biases).

    They are never re-fetched across the grid, so single-buffer them to halve their
    VMEM footprint.  Falls back to a plain BlockSpec if this JAX has no pipeline_mode.
    """
    try:
        return pl.BlockSpec(shape, index_map, pipeline_mode=pl.Buffered(1))
    except TypeError:
        return pl.BlockSpec(shape, index_map)


# ----------------------------------------------------------------------------- wrapper
def mlp_pallas(x, params, *, batch_tile=None, h_tile=512,
               compute_dtype=jnp.bfloat16, force_stream=False):
    """3-layer MLP forward (matches nn.Sequential(Linear, ReLU, Linear, ReLU, Linear)).

    Weights stored as [in_dim, out_dim] (transposed vs nn.Linear), biases as [1, out_dim].
    compute_dtype: matmul-operand dtype (bf16 default; f32 for bit-exact semantics).
    """
    w1, b1, w2, b2, w3, b3 = params
    B, D_in = x.shape
    H = w1.shape[1]
    C = w3.shape[1]
    out_dtype = x.dtype

    default_bt, vmem_budget = _tpu_defaults()
    if batch_tile is None:
        batch_tile = default_bt

    cdt = jnp.dtype(compute_dtype)
    c_item = cdt.itemsize
    out_item = jnp.dtype(out_dtype).itemsize

    # --- Right-size the batch tile: sublane granularity (8 f32 / 16 bf16 / 32 int8),
    #     and never pad a small batch all the way up to the big default tile.
    sub = 8 if c_item >= 4 else (16 if c_item == 2 else 32)
    batch_tile = sub * pl.cdiv(batch_tile, sub)
    if B < batch_tile:
        batch_tile = sub * pl.cdiv(B, sub)
    num_tiles = pl.cdiv(B, batch_tile)
    B_pad = num_tiles * batch_tile
    if B_pad != B:
        x = jnp.pad(x, ((0, B_pad - B), (0, 0)))

    # --- Lane-dense output: pad classes to a multiple of 128 (unmasked full-lane stores).
    C_pad = 128 * pl.cdiv(C, 128)
    if C_pad != C:
        w3 = jnp.pad(w3, ((0, 0), (0, C_pad - C)))
        b3 = jnp.pad(b3, ((0, 0), (0, C_pad - C)))

    # --- Mixed precision: bf16 matmul operands, f32 biases / accumulation / epilogue.
    x = x.astype(cdt)
    w1 = w1.astype(cdt)
    w2 = w2.astype(cdt)
    w3 = w3.astype(cdt)
    b1 = b1.astype(jnp.float32)
    b2 = b2.astype(jnp.float32)
    b3 = b3.astype(jnp.float32)

    # --- Resident-path footprint (single-buffered weights, double-buffered x/out tiles,
    #     f32 h1/h2 intermediates, small headroom).
    resident_bytes = ((D_in * H + H * H + H * C_pad) * c_item + (2 * H + C_pad) * 4
                      + 2 * batch_tile * (D_in * c_item + C_pad * out_item)
                      + 2 * batch_tile * H * 4
                      + (2 << 20))
    use_stream = force_stream or (resident_bytes > vmem_budget)

    if not use_stream:
        grid = (num_tiles,)
        in_specs = [
            # x tile (streamed). If profiling shows exposed DMA at large D_in, bump this
            # one spec to pipeline_mode=pl.Buffered(3).
            pl.BlockSpec((batch_tile, D_in), lambda i: (i, 0)),
            _const_spec((D_in, H), lambda i: (0, 0)),      # w1 (resident)
            _const_spec((1, H), lambda i: (0, 0)),          # b1
            _const_spec((H, H), lambda i: (0, 0)),          # w2
            _const_spec((1, H), lambda i: (0, 0)),          # b2
            _const_spec((H, C_pad), lambda i: (0, 0)),      # w3 (lane-padded)
            _const_spec((1, C_pad), lambda i: (0, 0)),      # b3
        ]
        out_specs = pl.BlockSpec((batch_tile, C_pad), lambda i: (i, 0))
        scratch_shapes = []
        dim_sem = ("parallel",)          # batch tiles shard across TCs on v7x megacore
        kernel = mlp_kernel_resident
        H_eff = H
        vmem_needed = resident_bytes
    else:
        # Streamed / tiled-H path: pad H to a multiple of the (lane-aligned) h_tile.
        h_tile = 128 * pl.cdiv(max(h_tile, 128), 128)
        h_tile = min(h_tile, 128 * pl.cdiv(H, 128))
        num_k = pl.cdiv(H, h_tile)
        H_pad = num_k * h_tile
        if H_pad != H:
            w1 = jnp.pad(w1, ((0, 0), (0, H_pad - H)))
            b1 = jnp.pad(b1, ((0, 0), (0, H_pad - H)))
            w2 = jnp.pad(w2, ((0, H_pad - H), (0, H_pad - H)))
            b2 = jnp.pad(b2, ((0, 0), (0, H_pad - H)))
            w3 = jnp.pad(w3, ((0, H_pad - H), (0, 0)))

        grid = (num_tiles, num_k)
        in_specs = [
            pl.BlockSpec((batch_tile, D_in), lambda i, k: (i, 0)),   # x (same block over k)
            pl.BlockSpec((D_in, h_tile), lambda i, k: (0, k)),       # w1 column tile
            pl.BlockSpec((1, h_tile), lambda i, k: (0, k)),          # b1 tile
            pl.BlockSpec((h_tile, H_pad), lambda i, k: (k, 0)),      # w2 row tile (streamed)
            _const_spec((1, H_pad), lambda i, k: (0, 0)),            # b2 (resident)
            _const_spec((H_pad, C_pad), lambda i, k: (0, 0)),        # w3 (resident)
            _const_spec((1, C_pad), lambda i, k: (0, 0)),            # b3 (resident)
        ]
        out_specs = pl.BlockSpec((batch_tile, C_pad), lambda i, k: (i, 0))
        scratch_shapes = [pltpu.VMEM((batch_tile, H_pad), jnp.float32)]
        dim_sem = ("parallel", "arbitrary")   # reduction axis last, marked arbitrary
        kernel = mlp_kernel_streamed
        H_eff = H_pad
        vmem_needed = (
            (H_pad * C_pad) * c_item + (H_pad + C_pad) * 4      # resident w3, b2, b3
            + batch_tile * H_pad * 4                             # layer-2 accumulator
            + 2 * (batch_tile * D_in * c_item                    # double-buffered streams
                   + D_in * h_tile * c_item + h_tile * 4
                   + h_tile * H_pad * c_item
                   + batch_tile * C_pad * out_item)
            + (2 << 20))

    vmem_limit = int(min(max(vmem_needed, 16 << 20), vmem_budget))

    flops = 2 * B_pad * (D_in * H_eff + H_eff * H_eff + H_eff * C_pad)
    bytes_accessed = (B_pad * D_in * c_item + B_pad * C_pad * out_item
                      + (D_in * H_eff + H_eff * H_eff + H_eff * C_pad) * c_item
                      + (2 * H_eff + C_pad) * 4)

    out_padded = pl.pallas_call(
        kernel,
        out_shape=jax.ShapeDtypeStruct((B_pad, C_pad), out_dtype),
        grid_spec=pltpu.PrefetchScalarGridSpec(
            num_scalar_prefetch=0,
            grid=grid,
            in_specs=in_specs,
            out_specs=out_specs,
            scratch_shapes=scratch_shapes,
        ),
        compiler_params=pltpu.CompilerParams(
            dimension_semantics=dim_sem,
            vmem_limit_bytes=vmem_limit,
        ),
        cost_estimate=pl.CostEstimate(
            flops=int(flops), transcendentals=0, bytes_accessed=int(bytes_accessed)),
    )(x, w1, b1, w2, b2, w3, b3)

    # Slice away batch / class padding outside the kernel.
    return out_padded[:B, :C]


# ----------------------------------------------------------------------------- reference
def init_params(key, input_dim, hidden_dim, num_classes, dtype=jnp.float32):
    """Deterministic init mimicking nn.Linear's uniform(-1/sqrt(fan_in), 1/sqrt(fan_in))."""
    ks = jax.random.split(key, 6)

    def linear_init(kw, kb, fan_in, fan_out):
        bound = 1.0 / np.sqrt(fan_in)
        w = jax.random.uniform(kw, (fan_in, fan_out), dtype, -bound, bound)
        b = jax.random.uniform(kb, (1, fan_out), dtype, -bound, bound)
        return w, b

    w1, b1 = linear_init(ks[0], ks[1], input_dim, hidden_dim)
    w2, b2 = linear_init(ks[2], ks[3], hidden_dim, hidden_dim)
    w3, b3 = linear_init(ks[4], ks[5], hidden_dim, num_classes)
    return (w1, b1, w2, b2, w3, b3)


def mlp_ref(x, params):
    w1, b1, w2, b2, w3, b3 = params
    h1 = jnp.maximum(x @ w1 + b1, 0.0)
    h2 = jnp.maximum(h1 @ w2 + b2, 0.0)
    return h2 @ w3 + b3


# ----------------------------------------------------------------------------- main
if __name__ == "__main__":
    key = jax.random.PRNGKey(0)
    k_x, k_p = jax.random.split(key)

    batch, input_dim, hidden_dim, num_classes = 8, 32, 64, 2
    x = jax.random.normal(k_x, (batch, input_dim), jnp.float32)
    params = init_params(k_p, input_dim, hidden_dim, num_classes)
    ref = mlp_ref(x, params)

    # 1) Exact-precision path (f32 matmuls): matches the PyTorch module semantics tightly.
    run_f32 = jax.jit(functools.partial(mlp_pallas, compute_dtype=jnp.float32))
    out_f32 = jax.block_until_ready(run_f32(x, params))
    np.testing.assert_allclose(np.asarray(out_f32), np.asarray(ref), rtol=1e-5, atol=1e-5)

    # 2) Default bf16-matmul / f32-accumulate fast path.
    run_bf16 = jax.jit(mlp_pallas)
    out_bf16 = jax.block_until_ready(run_bf16(x, params))
    np.testing.assert_allclose(np.asarray(out_bf16), np.asarray(ref), rtol=5e-2, atol=5e-2)

    # 3) Tail handling: batch not a multiple of the sublane tile.
    x2 = jax.random.normal(jax.random.PRNGKey(1), (3, input_dim), jnp.float32)
    out2 = jax.block_until_ready(run_f32(x2, params))
    np.testing.assert_allclose(np.asarray(out2), np.asarray(mlp_ref(x2, params)),
                               rtol=1e-5, atol=1e-5)

    # 4) Streamed / tiled-H fallback (the path large hidden sizes take on v7x's 64 MiB VMEM),
    #    forced here at a small hidden size so it is exercised with 2 reduction steps.
    hd2 = 256
    params2 = init_params(jax.random.PRNGKey(2), input_dim, hd2, num_classes)
    x3 = jax.random.normal(jax.random.PRNGKey(3), (16, input_dim), jnp.float32)
    run_stream = jax.jit(functools.partial(
        mlp_pallas, compute_dtype=jnp.float32, force_stream=True, h_tile=128))
    out3 = jax.block_until_ready(run_stream(x3, params2))
    np.testing.assert_allclose(np.asarray(out3), np.asarray(mlp_ref(x3, params2)),
                               rtol=1e-5, atol=1e-5)

    print("KERNEL_OK")
</pallas_src>

<mosaic_0001>
module attributes {stable_mosaic.version = 11 : i64} {
  func.func @mlp_kernel_resident(%arg0: i32, %arg1: memref<8x32xf32, #tpu.memory_space<vmem>>, %arg2: memref<32x64xf32, #tpu.memory_space<vmem>>, %arg3: memref<1x64xf32, #tpu.memory_space<vmem>>, %arg4: memref<64x64xf32, #tpu.memory_space<vmem>>, %arg5: memref<1x64xf32, #tpu.memory_space<vmem>>, %arg6: memref<64x128xf32, #tpu.memory_space<vmem>>, %arg7: memref<1x128xf32, #tpu.memory_space<vmem>>, %arg8: memref<8x128xf32, #tpu.memory_space<vmem>>) attributes {dimension_semantics = [#tpu.dimension_semantics<parallel>], iteration_bounds = array<i64: 1>, scalar_prefetch = 0 : i64, scratch_operands = 0 : i64, tpu.core_type = #tpu.core_type<tc>, window_params = [{transform_indices = @transform_0, window_bounds = array<i64: 8, 32>}, {pipeline_mode = #tpu.pipeline_mode<synchronous>, transform_indices = @transform_1, window_bounds = array<i64: 32, 64>}, {pipeline_mode = #tpu.pipeline_mode<synchronous>, transform_indices = @transform_2, window_bounds = array<i64: 1, 64>}, {pipeline_mode = #tpu.pipeline_mode<synchronous>, transform_indices = @transform_3, window_bounds = array<i64: 64, 64>}, {pipeline_mode = #tpu.pipeline_mode<synchronous>, transform_indices = @transform_4, window_bounds = array<i64: 1, 64>}, {pipeline_mode = #tpu.pipeline_mode<synchronous>, transform_indices = @transform_5, window_bounds = array<i64: 64, 128>}, {pipeline_mode = #tpu.pipeline_mode<synchronous>, transform_indices = @transform_6, window_bounds = array<i64: 1, 128>}, {transform_indices = @transform_7, window_bounds = array<i64: 8, 128>}]} {
    %c0 = arith.constant 0 : index
    %c0_0 = arith.constant 0 : index
    %0 = vector.load %arg1[%c0, %c0_0] : memref<8x32xf32, #tpu.memory_space<vmem>>, vector<8x32xf32>
    %c0_1 = arith.constant 0 : index
    %c0_2 = arith.constant 0 : index
    %1 = vector.load %arg2[%c0_1, %c0_2] : memref<32x64xf32, #tpu.memory_space<vmem>>, vector<32x64xf32>
    %cst = arith.constant dense<0.000000e+00> : vector<8x64xf32>
    %2 = tpu.matmul %0, %1, %cst {dimension_numbers = #tpu.dot_dimension_numbers<[1], [0], [0], [1], [0, 0, 1, 1], [], []>} : vector<8x32xf32>, vector<32x64xf32>, vector<8x64xf32> -> vector<8x64xf32>
    %c0_3 = arith.constant 0 : index
    %c0_4 = arith.constant 0 : index
    %3 = vector.load %arg3[%c0_3, %c0_4] : memref<1x64xf32, #tpu.memory_space<vmem>>, vector<1x64xf32>
    %4 = vector.broadcast %3 : vector<1x64xf32> to vector<8x64xf32>
    %5 = arith.addf %2, %4 : vector<8x64xf32>
    %cst_5 = arith.constant 0.000000e+00 : f32
    %6 = vector.broadcast %cst_5 : f32 to vector<8x64xf32>
    %7 = arith.maximumf %5, %6 : vector<8x64xf32>
    %c0_6 = arith.constant 0 : index
    %c0_7 = arith.constant 0 : index
    %8 = vector.load %arg4[%c0_6, %c0_7] : memref<64x64xf32, #tpu.memory_space<vmem>>, vector<64x64xf32>
    %cst_8 = arith.constant dense<0.000000e+00> : vector<8x64xf32>
    %9 = tpu.matmul %7, %8, %cst_8 {dimension_numbers = #tpu.dot_dimension_numbers<[1], [0], [0], [1], [0, 0, 1, 1], [], []>} : vector<8x64xf32>, vector<64x64xf32>, vector<8x64xf32> -> vector<8x64xf32>
    %c0_9 = arith.constant 0 : index
    %c0_10 = arith.constant 0 : index
    %10 = vector.load %arg5[%c0_9, %c0_10] : memref<1x64xf32, #tpu.memory_space<vmem>>, vector<1x64xf32>
    %11 = vector.broadcast %10 : vector<1x64xf32> to vector<8x64xf32>
    %12 = arith.addf %9, %11 : vector<8x64xf32>
    %cst_11 = arith.constant 0.000000e+00 : f32
    %13 = vector.broadcast %cst_11 : f32 to vector<8x64xf32>
    %14 = arith.maximumf %12, %13 : vector<8x64xf32>
    %c0_12 = arith.constant 0 : index
    %c0_13 = arith.constant 0 : index
    %15 = vector.load %arg6[%c0_12, %c0_13] : memref<64x128xf32, #tpu.memory_space<vmem>>, vector<64x128xf32>
    %cst_14 = arith.constant dense<0.000000e+00> : vector<8x128xf32>
    %16 = tpu.matmul %14, %15, %cst_14 {dimension_numbers = #tpu.dot_dimension_numbers<[1], [0], [0], [1], [0, 0, 1, 1], [], []>} : vector<8x64xf32>, vector<64x128xf32>, vector<8x128xf32> -> vector<8x128xf32>
    %c0_15 = arith.constant 0 : index
    %c0_16 = arith.constant 0 : index
    %17 = vector.load %arg7[%c0_15, %c0_16] : memref<1x128xf32, #tpu.memory_space<vmem>>, vector<1x128xf32>
    %18 = vector.broadcast %17 : vector<1x128xf32> to vector<8x128xf32>
    %19 = arith.addf %16, %18 : vector<8x128xf32>
    %c0_17 = arith.constant 0 : index
    %c0_18 = arith.constant 0 : index
    %20 = vector.load %arg8[%c0_17, %c0_18] : memref<8x128xf32, #tpu.memory_space<vmem>>, vector<8x128xf32>
    tpu.vector_store %arg8[%c0_17, %c0_18], %19 {strides = array<i32>} : memref<8x128xf32, #tpu.memory_space<vmem>>, vector<8x128xf32>,
    return
  }
  func.func @transform_0(%arg0: i32) -> (i32, i32) {
    %c0_i32 = arith.constant 0 : i32
    %c0_i32_0 = arith.constant 0 : i32
    return %arg0, %c0_i32 : i32, i32
  }
  func.func @transform_1(%arg0: i32) -> (i32, i32) {
    %c0_i32 = arith.constant 0 : i32
    %c0_i32_0 = arith.constant 0 : i32
    %c0_i32_1 = arith.constant 0 : i32
    return %c0_i32, %c0_i32_0 : i32, i32
  }
  func.func @transform_2(%arg0: i32) -> (i32, i32) {
    %c0_i32 = arith.constant 0 : i32
    %c0_i32_0 = arith.constant 0 : i32
    %c0_i32_1 = arith.constant 0 : i32
    return %c0_i32, %c0_i32_0 : i32, i32
  }
  func.func @transform_3(%arg0: i32) -> (i32, i32) {
    %c0_i32 = arith.constant 0 : i32
    %c0_i32_0 = arith.constant 0 : i32
    %c0_i32_1 = arith.constant 0 : i32
    return %c0_i32, %c0_i32_0 : i32, i32
  }
  func.func @transform_4(%arg0: i32) -> (i32, i32) {
    %c0_i32 = arith.constant 0 : i32
    %c0_i32_0 = arith.constant 0 : i32
    %c0_i32_1 = arith.constant 0 : i32
    return %c0_i32, %c0_i32_0 : i32, i32
  }
  func.func @transform_5(%arg0: i32) -> (i32, i32) {
    %c0_i32 = arith.constant 0 : i32
    %c0_i32_0 = arith.constant 0 : i32
    %c0_i32_1 = arith.constant 0 : i32
    return %c0_i32, %c0_i32_0 : i32, i32
  }
  func.func @transform_6(%arg0: i32) -> (i32, i32) {
    %c0_i32 = arith.constant 0 : i32
    %c0_i32_0 = arith.constant 0 : i32
    %c0_i32_1 = arith.constant 0 : i32
    return %c0_i32, %c0_i32_0 : i32, i32
  }
  func.func @transform_7(%arg0: i32) -> (i32, i32) {
    %c0_i32 = arith.constant 0 : i32
    %c0_i32_0 = arith.constant 0 : i32
    return %arg0, %c0_i32 : i32, i32
  }
}

</mosaic_0001>

<llo_original>
// kernel: mlp_pallas.1
$region0: #{mlp_pallas.1}
  #allocation0 [shape = 'u32[]', space=smem, size = 0x4, offset = 0x4, fixed_abs, tag = 'smem constant byte address 0x4 - core index']
  #allocation1 [shape = 'u32[72,128]{1,0:T(1,128)}', space=vmem, size = 0x9000, scoped, tag = 'internal scratch']
  %s0 = inlined_call_operand.vmem [shape: f32[8,32], index: 0, kind: input, shape index: {}]
  %s1 = inlined_call_operand.vmem [shape: f32[32,64], index: 1, kind: input, shape index: {}]
  %s2 = inlined_call_operand.vmem [shape: f32[1,64], index: 2, kind: input, shape index: {}]
  %s3 = inlined_call_operand.vmem [shape: f32[64,64], index: 3, kind: input, shape index: {}]
  %s4 = inlined_call_operand.vmem [shape: f32[1,64], index: 4, kind: input, shape index: {}]
  %s5 = inlined_call_operand.vmem [shape: f32[64,128], index: 5, kind: input, shape index: {}]
  %s6 = inlined_call_operand.vmem [shape: f32[1,128], index: 6, kind: input, shape index: {}]
  %s7 = inlined_call_operand.vmem [shape: f32[8,128], index: 7, kind: output, shape index: {}]
  %s8 = sld [smem:[#allocation0]]
  $region38: #{mlp_pallas.1} parent=0
    _
  %s10 = ssub.s32 1, %s8
  %s11 = scalar_select 0, %s10, %s8
  // Predicated region
  $region2: #{mlp_pallas.1} parent=0 // pred_check
    _
  $region3: #{mlp_pallas.1} parent=0 // pred_check_branch
    %13 = sbr.rel (0) target = $region5
  $region4: #{mlp_pallas.1} parent=0 // pred_region
    _
  $region5: #{mlp_pallas.1} parent=0 // pred_fallthru
    _
  // Predicated region
  $region6: #{mlp_pallas.1} parent=0 // pred_check
    _
  $region7: #{mlp_pallas.1} parent=0 // pred_check_branch
    %15 = sbr.rel (0) target = $region9
  $region8: #{mlp_pallas.1} parent=0 // pred_region
    _
  $region9: #{mlp_pallas.1} parent=0 // pred_fallthru
    _
  // Predicated region
  $region10: #{mlp_pallas.1} parent=0 // pred_check
    _
  $region11: #{mlp_pallas.1} parent=0 // pred_check_branch
    %17 = sbr.rel (0) target = $region13
  $region12: #{mlp_pallas.1} parent=0 // pred_region
    _
  $region13: #{mlp_pallas.1} parent=0 // pred_fallthru
    _
  // Predicated region
  $region14: #{mlp_pallas.1} parent=0 // pred_check
    _
  $region15: #{mlp_pallas.1} parent=0 // pred_check_branch
    %19 = sbr.rel (0) target = $region17
  $region16: #{mlp_pallas.1} parent=0 // pred_region
    _
  $region17: #{mlp_pallas.1} parent=0 // pred_fallthru
    _
  // Predicated region
  $region18: #{mlp_pallas.1} parent=0 // pred_check
    _
  $region19: #{mlp_pallas.1} parent=0 // pred_check_branch
    %21 = sbr.rel (0) target = $region21
  $region20: #{mlp_pallas.1} parent=0 // pred_region
    _
  $region21: #{mlp_pallas.1} parent=0 // pred_fallthru
    _
  // Predicated region
  $region22: #{mlp_pallas.1} parent=0 // pred_check
    _
  $region23: #{mlp_pallas.1} parent=0 // pred_check_branch
    %23 = sbr.rel (0) target = $region25
  $region24: #{mlp_pallas.1} parent=0 // pred_region
    _
  $region25: #{mlp_pallas.1} parent=0 // pred_fallthru
    _
  // Predicated region
  $region26: #{mlp_pallas.1} parent=0 // pred_check
    _
  $region27: #{mlp_pallas.1} parent=0 // pred_check_branch
    %25 = sbr.rel (0) target = $region29
  $region28: #{mlp_pallas.1} parent=0 // pred_region
    _
  $region29: #{mlp_pallas.1} parent=0 // pred_fallthru
    _
  %v26 = vld [vmem:[%s0] sm:$0xff]
  %v27 = vld [vmem:[%s1] sm:$0xff]
  %v28 = vld [vmem:[%s1 + $0x8] sm:$0xff]
  %v29 = vld [vmem:[%s1 + $0x10] sm:$0xff]
  %v30 = vld [vmem:[%s1 + $0x18] sm:$0xff]
  %v31 = vld [vmem:[%s2] sm:$0x1]
  %v33 = vperm.slane %v31, 0
  %vm35 = vcmask 261120
  %v37 = vsel %vm35, %v26, 0
  %39 = vmatpush.msra.mxu0 0.0
  %40 = vmatpush.msra.mxu0 0.0
  %41 = vmatpush.msra.mxu0 0.0
  %42 = vmatpush.msra.mxu0 0.0
  %43 = vmatpush.msra.mxu0 0.0
  %44 = vmatpush.msra.mxu0 0.0
  %45 = vmatpush.msra.mxu0 0.0
  %46 = vmatpush.msra.mxu0 0.0
  %47 = vmatpush.msra.mxu0 0.0
  %48 = vmatpush.msra.mxu0 0.0
  %49 = vmatpush.msra.mxu0 0.0
  %50 = vmatpush.msra.mxu0 0.0
  %51 = vmatpush.msra.mxu0 %v30
  %52 = vmatpush.msra.mxu0 %v29
  %53 = vmatpush.msra.mxu0 %v28
  %54 = vmatpush.msra.mxu0 %v27
  %55 = vmatmul.f32.gmra.mxu0 %v37
  %v56 = vpop.f32.mrf.mxu0
  %v57 = vadd.f32 %v33, %v56
  %58 = vdwg.mxu0
  %v59 = vmax.f32 %v57, 0.0
  %v60 = vld [vmem:[%s3] sm:$0xff]
  %v61 = vld [vmem:[%s3 + $0x8] sm:$0xff]
  %v62 = vld [vmem:[%s3 + $0x10] sm:$0xff]
  %v63 = vld [vmem:[%s3 + $0x18] sm:$0xff]
  %v64 = vld [vmem:[%s3 + $0x20] sm:$0xff]
  %v65 = vld [vmem:[%s3 + $0x28] sm:$0xff]
  %v66 = vld [vmem:[%s3 + $0x30] sm:$0xff]
  %v67 = vld [vmem:[%s3 + $0x38] sm:$0xff]
  %v68 = vld [vmem:[%s4] sm:$0x1]
  %v70 = vperm.slane %v68, 0
  %vm72 = vcmask 523264
  %v74 = vsel %vm72, %v59, 0
  %76 = vmatpush.msra.mxu0 0.0
  %77 = vmatpush.msra.mxu0 0.0
  %78 = vmatpush.msra.mxu0 0.0
  %79 = vmatpush.msra.mxu0 0.0
  %80 = vmatpush.msra.mxu0 0.0
  %81 = vmatpush.msra.mxu0 0.0
  %82 = vmatpush.msra.mxu0 0.0
  %83 = vmatpush.msra.mxu0 0.0
  %84 = vmatpush.msra.mxu0 %v67
  %85 = vmatpush.msra.mxu0 %v66
  %86 = vmatpush.msra.mxu0 %v65
  %87 = vmatpush.msra.mxu0 %v64
  %88 = vmatpush.msra.mxu0 %v63
  %89 = vmatpush.msra.mxu0 %v62
  %90 = vmatpush.msra.mxu0 %v61
  %91 = vmatpush.msra.mxu0 %v60
  %92 = vmatmul.f32.gmra.mxu0 %v74
  %v93 = vpop.f32.mrf.mxu0
  %v94 = vadd.f32 %v70, %v93
  %95 = vdwg.mxu0
  %v96 = vmax.f32 %v94, 0.0
  %v97 = vld [vmem:[%s5] sm:$0xff]
  %v98 = vld [vmem:[%s5 + $0x8] sm:$0xff]
  %v99 = vld [vmem:[%s5 + $0x10] sm:$0xff]
  %v100 = vld [vmem:[%s5 + $0x18] sm:$0xff]
  %v101 = vld [vmem:[%s5 + $0x20] sm:$0xff]
  %v102 = vld [vmem:[%s5 + $0x28] sm:$0xff]
  %v103 = vld [vmem:[%s5 + $0x30] sm:$0xff]
  %v104 = vld [vmem:[%s5 + $0x38] sm:$0xff]
  %v105 = vld [vmem:[%s6] sm:$0x1]
  %v107 = vperm.slane %v105, 0
  %v110 = vsel %vm72, %v96, 0
  %112 = vmatpush.msra.mxu0 0.0
  %113 = vmatpush.msra.mxu0 0.0
  %114 = vmatpush.msra.mxu0 0.0
  %115 = vmatpush.msra.mxu0 0.0
  %116 = vmatpush.msra.mxu0 0.0
  %117 = vmatpush.msra.mxu0 0.0
  %118 = vmatpush.msra.mxu0 0.0
  %119 = vmatpush.msra.mxu0 0.0
  %120 = vmatpush.msra.mxu0 %v104
  %121 = vmatpush.msra.mxu0 %v103
  %122 = vmatpush.msra.mxu0 %v102
  %123 = vmatpush.msra.mxu0 %v101
  %124 = vmatpush.msra.mxu0 %v100
  %125 = vmatpush.msra.mxu0 %v99
  %126 = vmatpush.msra.mxu0 %v98
  %127 = vmatpush.msra.mxu0 %v97
  %128 = vmatmul.f32.gmra.mxu0 %v110
  %v129 = vpop.f32.mrf.mxu0
  %v130 = vadd.f32 %v107, %v129
  %131 = vdwg.mxu0
  %132 = vst [vmem:[%s7] sm:$0xff] %v130
  // Predicated region
  $region30: #{mlp_pallas.1} parent=0 // pred_check
    _
  $region31: #{mlp_pallas.1} parent=0 // pred_check_branch
    %134 = sbr.rel (0) target = $region33
  $region32: #{mlp_pallas.1} parent=0 // pred_region
    _
  $region33: #{mlp_pallas.1} parent=0 // pred_fallthru
    _
  // Predicated region
  $region34: #{mlp_pallas.1} parent=0 // pred_check
    _
  $region35: #{mlp_pallas.1} parent=0 // pred_check_branch
    %136 = sbr.rel (0) target = $region37
  $region36: #{mlp_pallas.1} parent=0 // pred_region
    _
  $region37: #{mlp_pallas.1} parent=0 // pred_fallthru
    _

</llo_original>
